<compile_context>
chip_gen: v7x
topology: tpu7x:2x2x1
jax: 0.10.0
libtpu: 0.0.40
codegen_flags: <defaults>
</compile_context>

<pallas_src>
import jax
import jax.numpy as jnp
from jax.experimental import pallas as pl
from jax.experimental.pallas import tpu as pltpu

LANE = 128  # TPU lane width


def _round_up(x, m):
    return ((x + m - 1) // m) * m


def _cdiv(a, b):
    return (a + b - 1) // b


def _choose_bm(batch):
    """Per-branch batch-tile rows: multiple of 8, <=128, and >=2 grid steps when B > 8."""
    rows = _round_up(batch, 8)
    if rows <= 8:
        return 8
    nt = max(2, _cdiv(rows, 128))            # >= 2 steps so v7x can shard across its 2 TCs
    return max(8, min(128, _round_up(_cdiv(rows, nt), 8)))


def _vmem_limit_bytes(bm, td, td_pad, ln_pad, l_pad):
    """Explicit scoped-VMEM budget from the real footprint (+50% margin, +2 MiB)."""
    weights = (td_pad * ln_pad * 2          # Wt_fold^T  bf16 (single-buffered)
               + ln_pad * 4                 # bt_fold    f32
               + 2 * ln_pad * l_pad * 2     # W1^T, W2^T bf16
               + l_pad * 4)                 # b1+b2      f32
    inputs = 2 * 2 * bm * td * 4            # x1, x2 f32 tiles, double-buffered
    output = 2 * bm * l_pad * 4             # out tile f32, double-buffered
    scratch = 2 * bm * td_pad * 2           # xs bf16 scratch
    live = 2 * bm * ln_pad * (4 + 4 + 2)    # h/g f32 values + bf16 copies (headroom)
    total = weights + inputs + output + scratch + live
    return int(min(64 << 20, max(int(total * 1.5) + (2 << 20), 8 << 20)))


def _make_kernel(bm, td, td_pad):
    """Kernel closure over static per-branch tile rows `bm` and text dims."""

    def kernel(alpha_ref, x1_ref, x2_ref, wt_ref, bt_ref, w1_ref, w2_ref,
               bcls_ref, out_ref, xs_ref):
        alpha = alpha_ref[0]

        # Branch stacking + f32->bf16 cast + K-pad, all inside VMEM (no wrapper HBM pass).
        # Rows [0:bm] = branch 1, [bm:2bm] = branch 2.
        if td != td_pad:
            xs_ref[...] = jnp.zeros_like(xs_ref)   # keep K-pad lanes zero (every step: safe
                                                   # under "parallel" / megacore splitting)
        xs_ref[0:bm, 0:td] = x1_ref[...].astype(jnp.bfloat16)
        xs_ref[bm:2 * bm, 0:td] = x2_ref[...].astype(jnp.bfloat16)

        # Stage 1+2: transformation with the linear GCN folded in -> one MXU pass for both
        # branches.  alpha/(1-alpha) scaling commutes with the matmul, applied to f32 result.
        h = jnp.dot(xs_ref[...], wt_ref[...], preferred_element_type=jnp.float32)
        row = jax.lax.broadcasted_iota(jnp.int32, (2 * bm, 1), 0)
        scale = jnp.where(row < bm, alpha, 1.0 - alpha)
        g = jnp.maximum(scale * h + bt_ref[...], 0.0)        # == relu(A @ H @ Wg), flattened

        # Stage 3: per-branch classifiers as two dots + add (no in-kernel lane concat).
        g1 = g[0:bm, :].astype(jnp.bfloat16)
        g2 = g[bm:2 * bm, :].astype(jnp.bfloat16)
        out_ref[...] = (jnp.dot(g1, w1_ref[...], preferred_element_type=jnp.float32)
                        + jnp.dot(g2, w2_ref[...], preferred_element_type=jnp.float32)
                        + bcls_ref[...])

    return kernel


def prepare_params(params):
    """One-time weight prep (outside the hot path): fold GCN, transpose, pad to 128, cast."""
    L, nd = params["A"].shape[0], params["Wg"].shape[0]
    td = params["Wt"].shape[1]
    LN = L * nd
    td_pad = _round_up(td, LANE)
    ln_pad = _round_up(LN, LANE)
    l_pad = _round_up(L, LANE)

    # Fold the linear one-layer GCN stand-in into the transformation (no (LN,LN) kron!):
    #   A @ (x @ Wt^T + bt).reshape(L, nd) @ Wg  ==  x @ Wt_fold^T + bt_fold
    wt3 = params["Wt"].reshape(L, nd, td)
    wt_fold = jnp.einsum("lm,mdt,de->let", params["A"], wt3, params["Wg"]).reshape(LN, td)
    bt_fold = (params["A"] @ params["bt"].reshape(L, nd) @ params["Wg"]).reshape(LN)

    wt_t = jnp.zeros((td_pad, ln_pad), jnp.bfloat16).at[:td, :LN].set(
        wt_fold.T.astype(jnp.bfloat16))
    bt = jnp.zeros((1, ln_pad), jnp.float32).at[0, :LN].set(bt_fold)
    w1t = jnp.zeros((ln_pad, l_pad), jnp.bfloat16).at[:LN, :L].set(
        params["W1"].T.astype(jnp.bfloat16))
    w2t = jnp.zeros((ln_pad, l_pad), jnp.bfloat16).at[:LN, :L].set(
        params["W2"].T.astype(jnp.bfloat16))
    bcls = jnp.zeros((1, l_pad), jnp.float32).at[0, :L].set(params["b1"] + params["b2"])

    return {"wt_t": wt_t, "bt": bt, "w1t": w1t, "w2t": w2t, "bcls": bcls,
            "td": td, "td_pad": td_pad, "ln_pad": ln_pad, "L": L, "l_pad": l_pad}


def hibbntp_forward(text_feature1, text_feature2, alpha, prepared):
    """Wrapper: flatten inputs (view only), batch-pad if needed, invoke the Pallas kernel."""
    B = text_feature1.shape[0]
    td = prepared["td"]
    td_pad, ln_pad = prepared["td_pad"], prepared["ln_pad"]
    L, l_pad = prepared["L"], prepared["l_pad"]

    x1 = text_feature1.reshape(B, -1)
    x2 = text_feature2.reshape(B, -1)
    assert x1.shape[1] == td and x2.shape[1] == td

    bm = _choose_bm(B)
    Bp = _round_up(B, bm)
    nt = Bp // bm
    if Bp != B:
        pad = ((0, Bp - B), (0, 0))
        x1 = jnp.pad(x1, pad)
        x2 = jnp.pad(x2, pad)

    alpha_arr = jnp.asarray([alpha], dtype=jnp.float32)
    single = pl.Buffered(1)   # constant-index weights: single-buffer (halve weight VMEM)

    out = pl.pallas_call(
        _make_kernel(bm, td, td_pad),
        out_shape=jax.ShapeDtypeStruct((Bp, l_pad), jnp.float32),
        grid=(nt,),
        in_specs=[
            pl.BlockSpec(memory_space=pltpu.MemorySpace.SMEM),            # alpha scalar
            pl.BlockSpec((bm, td), lambda i: (i, 0)),                     # x1 batch tile (f32)
            pl.BlockSpec((bm, td), lambda i: (i, 0)),                     # x2 batch tile (f32)
            pl.BlockSpec((td_pad, ln_pad), lambda i: (0, 0), pipeline_mode=single),  # Wt_fold^T
            pl.BlockSpec((1, ln_pad), lambda i: (0, 0), pipeline_mode=single),       # bt_fold
            pl.BlockSpec((ln_pad, l_pad), lambda i: (0, 0), pipeline_mode=single),   # W1^T (padded)
            pl.BlockSpec((ln_pad, l_pad), lambda i: (0, 0), pipeline_mode=single),   # W2^T (padded)
            pl.BlockSpec((1, l_pad), lambda i: (0, 0), pipeline_mode=single),        # b1 + b2
        ],
        out_specs=pl.BlockSpec((bm, l_pad), lambda i: (i, 0)),            # lane-dense logits
        scratch_shapes=[pltpu.VMEM((2 * bm, td_pad), jnp.bfloat16)],      # stacked-branch input
        compiler_params=pltpu.CompilerParams(
            dimension_semantics=("parallel",),                            # megacore batch split
            vmem_limit_bytes=_vmem_limit_bytes(bm, td, td_pad, ln_pad, l_pad)),
    )(alpha_arr, x1, x2, prepared["wt_t"], prepared["bt"],
      prepared["w1t"], prepared["w2t"], prepared["bcls"])

    return out[:B, :L]


def make_params(key, text_dim, num_labels, node_dim):
    """Deterministic synthetic parameters (shapes follow the module __init__)."""
    LN = num_labels * node_dim
    ks = jax.random.split(key, 8)
    scale_t = 1.0 / jnp.sqrt(text_dim)
    scale_l = 1.0 / jnp.sqrt(LN)
    return {
        # transformation: Linear(text_dim -> L*node_dim)
        "Wt": jax.random.uniform(ks[0], (LN, text_dim), jnp.float32, -scale_t, scale_t),
        "bt": jax.random.uniform(ks[1], (LN,), jnp.float32, -scale_t, scale_t),
        # linear1 / linear2: Linear(L*node_dim -> L)
        "W1": jax.random.uniform(ks[2], (num_labels, LN), jnp.float32, -scale_l, scale_l),
        "b1": jax.random.uniform(ks[3], (num_labels,), jnp.float32, -scale_l, scale_l),
        "W2": jax.random.uniform(ks[4], (num_labels, LN), jnp.float32, -scale_l, scale_l),
        "b2": jax.random.uniform(ks[5], (num_labels,), jnp.float32, -scale_l, scale_l),
        # graph-model stand-in: row-normalized (I + ones) adjacency + node mixer
        "A": (jnp.eye(num_labels) + jnp.ones((num_labels, num_labels))) / (num_labels + 1.0),
        "Wg": jax.random.uniform(ks[6], (node_dim, node_dim), jnp.float32,
                                 -1.0 / jnp.sqrt(node_dim), 1.0 / jnp.sqrt(node_dim)),
    }


def reference_forward(tf1, tf2, alpha, params):
    """Pure-JAX f32 reference mirroring the PyTorch forward (eval mode, unfused)."""
    B = tf1.shape[0]
    L, nd = params["A"].shape[0], params["Wg"].shape[0]
    x1 = alpha * tf1.reshape(B, -1)
    x2 = (1.0 - alpha) * tf2.reshape(B, -1)

    def branch(x, W, b):
        h = x @ params["Wt"].T + params["bt"]
        h = h.reshape(B, L, nd)
        g = jax.nn.relu(jnp.einsum("lm,bmd,de->ble", params["A"], h, params["Wg"]))
        return g.reshape(B, -1) @ W.T + b

    return branch(x1, params["W1"], params["b1"]) + branch(x2, params["W2"], params["b2"])


if __name__ == "__main__":
    # small shapes: batch=2, seq=8, hidden=4 -> text_dim=32 ; labels=8, node_dim=16
    B, SEQ, HID = 2, 8, 4
    NUM_LABELS, NODE_DIM = 8, 16
    TEXT_DIM = SEQ * HID

    key = jax.random.PRNGKey(0)
    k1, k2, kp = jax.random.split(key, 3)
    text_feature1 = jax.random.normal(k1, (B, SEQ, HID), jnp.float32)
    text_feature2 = jax.random.normal(k2, (B, SEQ, HID), jnp.float32)
    alpha = 0.7

    params = make_params(kp, TEXT_DIM, NUM_LABELS, NODE_DIM)
    prepared = prepare_params(params)      # one-time weight prep, outside the hot path

    logits = hibbntp_forward(text_feature1, text_feature2, alpha, prepared)
    logits = jax.block_until_ready(logits)

    ref = reference_forward(text_feature1, text_feature2, alpha, params)
    assert logits.shape == (B, NUM_LABELS)
    # bf16 MXU operands with f32 accumulation -> loosened tolerance vs f32 reference.
    assert jnp.allclose(logits, ref, atol=5e-2, rtol=5e-2), "mismatch vs reference"

    print("KERNEL_OK")
</pallas_src>

<mosaic_0001>
module attributes {stable_mosaic.version = 11 : i64} {
  func.func @kernel(%arg0: i32, %arg1: memref<1xf32, #tpu.memory_space<smem>>, %arg2: memref<8x32xf32, #tpu.memory_space<vmem>>, %arg3: memref<8x32xf32, #tpu.memory_space<vmem>>, %arg4: memref<128x128xbf16, #tpu.memory_space<vmem>>, %arg5: memref<1x128xf32, #tpu.memory_space<vmem>>, %arg6: memref<128x128xbf16, #tpu.memory_space<vmem>>, %arg7: memref<128x128xbf16, #tpu.memory_space<vmem>>, %arg8: memref<1x128xf32, #tpu.memory_space<vmem>>, %arg9: memref<8x128xf32, #tpu.memory_space<vmem>>, %arg10: memref<16x128xbf16, #tpu.memory_space<vmem>>) attributes {dimension_semantics = [#tpu.dimension_semantics<parallel>], iteration_bounds = array<i64: 1>, scalar_prefetch = 0 : i64, scratch_operands = 1 : i64, tpu.core_type = #tpu.core_type<tc>, window_params = [{transform_indices = @transform_0, window_bounds = array<i64: 1>}, {transform_indices = @transform_1, window_bounds = array<i64: 8, 32>}, {transform_indices = @transform_2, window_bounds = array<i64: 8, 32>}, {pipeline_mode = #tpu.pipeline_mode<synchronous>, transform_indices = @transform_3, window_bounds = array<i64: 128, 128>}, {pipeline_mode = #tpu.pipeline_mode<synchronous>, transform_indices = @transform_4, window_bounds = array<i64: 1, 128>}, {pipeline_mode = #tpu.pipeline_mode<synchronous>, transform_indices = @transform_5, window_bounds = array<i64: 128, 128>}, {pipeline_mode = #tpu.pipeline_mode<synchronous>, transform_indices = @transform_6, window_bounds = array<i64: 128, 128>}, {pipeline_mode = #tpu.pipeline_mode<synchronous>, transform_indices = @transform_7, window_bounds = array<i64: 1, 128>}, {transform_indices = @transform_8, window_bounds = array<i64: 8, 128>}]} {
    %c0 = arith.constant 0 : index
    %0 = memref.load %arg1[%c0] : memref<1xf32, #tpu.memory_space<smem>>
    %cst = arith.constant 0.000000e+00 : bf16
    %1 = vector.broadcast %cst : bf16 to vector<16x128xbf16>
    %c0_0 = arith.constant 0 : index
    %c0_1 = arith.constant 0 : index
    %2 = vector.load %arg10[%c0_0, %c0_1] : memref<16x128xbf16, #tpu.memory_space<vmem>>, vector<16x128xbf16>
    tpu.vector_store %arg10[%c0_0, %c0_1], %1 {strides = array<i32>} : memref<16x128xbf16, #tpu.memory_space<vmem>>, vector<16x128xbf16>,
    %c0_2 = arith.constant 0 : index
    %c0_3 = arith.constant 0 : index
    %3 = vector.load %arg2[%c0_2, %c0_3] : memref<8x32xf32, #tpu.memory_space<vmem>>, vector<8x32xf32>
    %4 = arith.truncf %3 : vector<8x32xf32> to vector<8x32xbf16>
    %c0_4 = arith.constant 0 : index
    %c0_5 = arith.constant 0 : index
    %5 = vector.load %arg10[%c0_4, %c0_5] : memref<16x128xbf16, #tpu.memory_space<vmem>>, vector<8x32xbf16>
    tpu.vector_store %arg10[%c0_4, %c0_5], %4 {strides = array<i32>} : memref<16x128xbf16, #tpu.memory_space<vmem>>, vector<8x32xbf16>,
    %c0_6 = arith.constant 0 : index
    %c0_7 = arith.constant 0 : index
    %6 = vector.load %arg3[%c0_6, %c0_7] : memref<8x32xf32, #tpu.memory_space<vmem>>, vector<8x32xf32>
    %7 = arith.truncf %6 : vector<8x32xf32> to vector<8x32xbf16>
    %c8 = arith.constant 8 : index
    %c0_8 = arith.constant 0 : index
    %8 = vector.load %arg10[%c8, %c0_8] : memref<16x128xbf16, #tpu.memory_space<vmem>>, vector<8x32xbf16>
    tpu.vector_store %arg10[%c8, %c0_8], %7 {strides = array<i32>} : memref<16x128xbf16, #tpu.memory_space<vmem>>, vector<8x32xbf16>,
    %c0_9 = arith.constant 0 : index
    %c0_10 = arith.constant 0 : index
    %9 = vector.load %arg10[%c0_9, %c0_10] : memref<16x128xbf16, #tpu.memory_space<vmem>>, vector<16x128xbf16>
    %c0_11 = arith.constant 0 : index
    %c0_12 = arith.constant 0 : index
    %10 = vector.load %arg4[%c0_11, %c0_12] : memref<128x128xbf16, #tpu.memory_space<vmem>>, vector<128x128xbf16>
    %cst_13 = arith.constant dense<0.000000e+00> : vector<16x128xf32>
    %11 = tpu.matmul %9, %10, %cst_13 {dimension_numbers = #tpu.dot_dimension_numbers<[1], [0], [0], [1], [0, 0, 1, 1], [], []>} : vector<16x128xbf16>, vector<128x128xbf16>, vector<16x128xf32> -> vector<16x128xf32>
    %12 = tpu.iota {dimensions = array<i32: 0>} : vector<16x1xi32>
    %c8_i32 = arith.constant 8 : i32
    %13 = vector.broadcast %c8_i32 : i32 to vector<16x1xi32>
    %14 = arith.cmpi slt, %12, %13 : vector<16x1xi32>
    %cst_14 = arith.constant 1.000000e+00 : f32
    %15 = arith.subf %cst_14, %0 : f32
    %16 = vector.broadcast %0 : f32 to vector<16x1xf32>
    %17 = vector.broadcast %15 : f32 to vector<16x1xf32>
    %18 = arith.select %14, %16, %17 : vector<16x1xi1>, vector<16x1xf32>
    %19 = vector.broadcast %18 : vector<16x1xf32> to vector<16x128xf32>
    %20 = arith.mulf %19, %11 : vector<16x128xf32>
    %c0_15 = arith.constant 0 : index
    %c0_16 = arith.constant 0 : index
    %21 = vector.load %arg5[%c0_15, %c0_16] : memref<1x128xf32, #tpu.memory_space<vmem>>, vector<1x128xf32>
    %22 = vector.broadcast %21 : vector<1x128xf32> to vector<16x128xf32>
    %23 = arith.addf %20, %22 : vector<16x128xf32>
    %cst_17 = arith.constant 0.000000e+00 : f32
    %24 = vector.broadcast %cst_17 : f32 to vector<16x128xf32>
    %25 = arith.maximumf %23, %24 : vector<16x128xf32>
    %26 = vector.extract_strided_slice %25 {offsets = [0, 0], sizes = [8, 128], strides = [1, 1]} : vector<16x128xf32> to vector<8x128xf32>
    %27 = arith.truncf %26 : vector<8x128xf32> to vector<8x128xbf16>
    %28 = vector.extract_strided_slice %25 {offsets = [8, 0], sizes = [8, 128], strides = [1, 1]} : vector<16x128xf32> to vector<8x128xf32>
    %29 = arith.truncf %28 : vector<8x128xf32> to vector<8x128xbf16>
    %c0_18 = arith.constant 0 : index
    %c0_19 = arith.constant 0 : index
    %30 = vector.load %arg6[%c0_18, %c0_19] : memref<128x128xbf16, #tpu.memory_space<vmem>>, vector<128x128xbf16>
    %cst_20 = arith.constant dense<0.000000e+00> : vector<8x128xf32>
    %31 = tpu.matmul %27, %30, %cst_20 {dimension_numbers = #tpu.dot_dimension_numbers<[1], [0], [0], [1], [0, 0, 1, 1], [], []>} : vector<8x128xbf16>, vector<128x128xbf16>, vector<8x128xf32> -> vector<8x128xf32>
    %c0_21 = arith.constant 0 : index
    %c0_22 = arith.constant 0 : index
    %32 = vector.load %arg7[%c0_21, %c0_22] : memref<128x128xbf16, #tpu.memory_space<vmem>>, vector<128x128xbf16>
    %cst_23 = arith.constant dense<0.000000e+00> : vector<8x128xf32>
    %33 = tpu.matmul %29, %32, %cst_23 {dimension_numbers = #tpu.dot_dimension_numbers<[1], [0], [0], [1], [0, 0, 1, 1], [], []>} : vector<8x128xbf16>, vector<128x128xbf16>, vector<8x128xf32> -> vector<8x128xf32>
    %34 = arith.addf %31, %33 : vector<8x128xf32>
    %c0_24 = arith.constant 0 : index
    %c0_25 = arith.constant 0 : index
    %35 = vector.load %arg8[%c0_24, %c0_25] : memref<1x128xf32, #tpu.memory_space<vmem>>, vector<1x128xf32>
    %36 = vector.broadcast %35 : vector<1x128xf32> to vector<8x128xf32>
    %37 = arith.addf %34, %36 : vector<8x128xf32>
    %c0_26 = arith.constant 0 : index
    %c0_27 = arith.constant 0 : index
    %38 = vector.load %arg9[%c0_26, %c0_27] : memref<8x128xf32, #tpu.memory_space<vmem>>, vector<8x128xf32>
    tpu.vector_store %arg9[%c0_26, %c0_27], %37 {strides = array<i32>} : memref<8x128xf32, #tpu.memory_space<vmem>>, vector<8x128xf32>,
    return
  }
  func.func @transform_0(%arg0: i32) -> i32 {
    %c0_i32 = arith.constant 0 : i32
    %c0_i32_0 = arith.constant 0 : i32
    return %c0_i32 : i32
  }
  func.func @transform_1(%arg0: i32) -> (i32, i32) {
    %c0_i32 = arith.constant 0 : i32
    %c0_i32_0 = arith.constant 0 : i32
    return %arg0, %c0_i32 : i32, i32
  }
  func.func @transform_2(%arg0: i32) -> (i32, i32) {
    %c0_i32 = arith.constant 0 : i32
    %c0_i32_0 = arith.constant 0 : i32
    return %arg0, %c0_i32 : i32, i32
  }
  func.func @transform_3(%arg0: i32) -> (i32, i32) {
    %c0_i32 = arith.constant 0 : i32
    %c0_i32_0 = arith.constant 0 : i32
    %c0_i32_1 = arith.constant 0 : i32
    return %c0_i32, %c0_i32_0 : i32, i32
  }
  func.func @transform_4(%arg0: i32) -> (i32, i32) {
    %c0_i32 = arith.constant 0 : i32
    %c0_i32_0 = arith.constant 0 : i32
    %c0_i32_1 = arith.constant 0 : i32
    return %c0_i32, %c0_i32_0 : i32, i32
  }
  func.func @transform_5(%arg0: i32) -> (i32, i32) {
    %c0_i32 = arith.constant 0 : i32
    %c0_i32_0 = arith.constant 0 : i32
    %c0_i32_1 = arith.constant 0 : i32
    return %c0_i32, %c0_i32_0 : i32, i32
  }
  func.func @transform_6(%arg0: i32) -> (i32, i32) {
    %c0_i32 = arith.constant 0 : i32
    %c0_i32_0 = arith.constant 0 : i32
    %c0_i32_1 = arith.constant 0 : i32
    return %c0_i32, %c0_i32_0 : i32, i32
  }
  func.func @transform_7(%arg0: i32) -> (i32, i32) {
    %c0_i32 = arith.constant 0 : i32
    %c0_i32_0 = arith.constant 0 : i32
    %c0_i32_1 = arith.constant 0 : i32
    return %c0_i32, %c0_i32_0 : i32, i32
  }
  func.func @transform_8(%arg0: i32) -> (i32, i32) {
    %c0_i32 = arith.constant 0 : i32
    %c0_i32_0 = arith.constant 0 : i32
    return %arg0, %c0_i32 : i32, i32
  }
}

</mosaic_0001>

<llo_original>
// kernel: tpu_custom_call.1
$region0: #{tpu_custom_call.1}
  #allocation0 [shape = 'u32[]', space=smem, size = 0x4, offset = 0x4, fixed_abs, tag = 'smem constant byte address 0x4 - core index']
  #allocation1 [shape = 'u32[144,128]{1,0:T(1,128)}', space=vmem, size = 0x12000, scoped, tag = 'internal scratch']
  #allocation2 [shape = 'bf16[16,128]{1,0:T(16,128)(2,1)}', space=vmem, size = 0x1000, scoped, tag = 'scratch operand']
  #allocation3 [shape = 'f32[1]{0:T(128)S(6)}', space=smem, size = 0x200, scoped, tag = 'scoped memory for tpu_custom_call.1']
  %s0 = inlined_call_operand.<no memory space> [shape: f32[1], index: 0, kind: input, shape index: {}]
  %s1 = inlined_call_operand.hbm [shape: f32[8,32], index: 1, kind: input, shape index: {}]
  %s2 = inlined_call_operand.hbm [shape: f32[8,32], index: 2, kind: input, shape index: {}]
  %s3 = inlined_call_operand.hbm [shape: bf16[128,128], index: 3, kind: input, shape index: {}]
  %s4 = inlined_call_operand.vmem [shape: f32[1,128], index: 4, kind: input, shape index: {}]
  %s5 = inlined_call_operand.hbm [shape: bf16[128,128], index: 5, kind: input, shape index: {}]
  %s6 = inlined_call_operand.hbm [shape: bf16[128,128], index: 6, kind: input, shape index: {}]
  %s7 = inlined_call_operand.vmem [shape: f32[1,128], index: 7, kind: input, shape index: {}]
  %s8 = inlined_call_operand.hbm [shape: f32[8,128], index: 8, kind: output, shape index: {}]
  %s9 = sld [smem:[#allocation0]]
  $region62: #{tpu_custom_call.1} parent=0
    _
  %s11 = ssub.s32 1, %s9
  %s12 = scalar_select 0, %s11, %s9
  %13 = sst [smem:[#allocation3]] %s0
  $region1: #{tpu_custom_call.1} parent=0
    #allocation4 [shape = 'u8[4096]{0}', space=vmem, size = 0x1000, scoped, tag = 'input window, operand 1, single buffered']
    #allocation5 [shape = 's32[1]{0}', space=sflag, size = 0x4, scoped, tag = 'scoped memory for tpu_custom_call.1']
    #allocation6 [shape = 's32[1]{0}', space=sflag, size = 0x4, scoped, tag = 'scoped memory for tpu_custom_call.1']
    #allocation7 [shape = 'u8[4096]{0}', space=vmem, size = 0x1000, scoped, tag = 'input window, operand 2, single buffered']
    #allocation8 [shape = 's32[1]{0}', space=sflag, size = 0x4, scoped, tag = 'scoped memory for tpu_custom_call.1']
    #allocation9 [shape = 'u8[32768]{0}', space=vmem, size = 0x8000, scoped, tag = 'input window, operand 3, single buffered']
    #allocation10 [shape = 'u8[32768]{0}', space=vmem, size = 0x8000, scoped, tag = 'input window, operand 5, single buffered']
    #allocation11 [shape = 's32[1]{0}', space=sflag, size = 0x4, scoped, tag = 'scoped memory for tpu_custom_call.1']
    #allocation12 [shape = 'u8[32768]{0}', space=vmem, size = 0x8000, scoped, tag = 'input window, operand 6, single buffered']
    #allocation13 [shape = 'u8[4096]{0}', space=vmem, size = 0x1000, scoped, tag = 'output window, operand 0, single buffered']
    %14 = vsyncpa [#allocation5], 0
    %15 = vsyncpa [#allocation8], 0
    %16 = vsyncpa [#allocation11], 0
    %17 = vsyncpa [#allocation6], 0
    // Predicated region
    $region2: #{tpu_custom_call.1} parent=1 // pred_check
      _
    $region3: #{tpu_custom_call.1} parent=1 // pred_check_branch
      %19 = sbr.rel (0) target = $region5
    $region4: #{tpu_custom_call.1} parent=1 // pred_region
      _
    $region5: #{tpu_custom_call.1} parent=1 // pred_fallthru
      _
    // Predicated region
    $region6: #{tpu_custom_call.1} parent=1 // pred_check
      _
    $region7: #{tpu_custom_call.1} parent=1 // pred_check_branch
      %21 = sbr.rel (0) target = $region9
    $region8: #{tpu_custom_call.1} parent=1 // pred_region
      %s23 = ssub.s32 128, 128
      %24 = vsyncadd [#allocation5], %s23
      %s26 = sshll.u32 [#allocation4], 4
      %s27 = int_to_ptr.vmem [resolvable:$true] %s26
      %29 = dma.hbm_to_vmem [thread:$0]  %s1, 128, %s27, [#allocation5]
    $region9: #{tpu_custom_call.1} parent=1 // pred_fallthru
      _
    // Predicated region
    $region10: #{tpu_custom_call.1} parent=1 // pred_check
      _
    $region11: #{tpu_custom_call.1} parent=1 // pred_check_branch
      %31 = sbr.rel (0) target = $region13
    $region12: #{tpu_custom_call.1} parent=1 // pred_region
      %s33 = ssub.s32 128, 128
      %34 = vsyncadd [#allocation8], %s33
      %s36 = sshll.u32 [#allocation7], 4
      %s37 = int_to_ptr.vmem [resolvable:$true] %s36
      %39 = dma.hbm_to_vmem [thread:$0]  %s2, 128, %s37, [#allocation8]
    $region13: #{tpu_custom_call.1} parent=1 // pred_fallthru
      _
    // Predicated region
    $region14: #{tpu_custom_call.1} parent=1 // pred_check
      _
    $region15: #{tpu_custom_call.1} parent=1 // pred_check_branch
      %41 = sbr.rel (0) target = $region17
    $region16: #{tpu_custom_call.1} parent=1 // pred_region
      %s43 = ssub.s32 1024, 1024
      %44 = vsyncadd [#allocation8], %s43
      %s45 = sshll.u32 [#allocation9], 4
      %s46 = int_to_ptr.vmem [resolvable:$true] %s45
      %51 = dma.hbm_to_vmem [thread:$0]  %s3, 1024, %s46, [#allocation8], 64, 64, 4
    $region17: #{tpu_custom_call.1} parent=1 // pred_fallthru
      _
    // Predicated region
    $region18: #{tpu_custom_call.1} parent=1 // pred_check
      _
    $region19: #{tpu_custom_call.1} parent=1 // pred_check_branch
      %53 = sbr.rel (0) target = $region21
    $region20: #{tpu_custom_call.1} parent=1 // pred_region
      _
    $region21: #{tpu_custom_call.1} parent=1 // pred_fallthru
      _
    // Predicated region
    $region22: #{tpu_custom_call.1} parent=1 // pred_check
      _
    $region23: #{tpu_custom_call.1} parent=1 // pred_check_branch
      %55 = sbr.rel (0) target = $region25
    $region24: #{tpu_custom_call.1} parent=1 // pred_region
      %s57 = ssub.s32 1024, 1024
      %58 = vsyncadd [#allocation11], %s57
      %s59 = sshll.u32 [#allocation10], 4
      %s60 = int_to_ptr.vmem [resolvable:$true] %s59
      %65 = dma.hbm_to_vmem [thread:$0]  %s5, 1024, %s60, [#allocation11], 64, 64, 4
    $region25: #{tpu_custom_call.1} parent=1 // pred_fallthru
      _
    // Predicated region
    $region26: #{tpu_custom_call.1} parent=1 // pred_check
      _
    $region27: #{tpu_custom_call.1} parent=1 // pred_check_branch
      %67 = sbr.rel (0) target = $region29
    $region28: #{tpu_custom_call.1} parent=1 // pred_region
      %s69 = ssub.s32 1024, 1024
      %70 = vsyncadd [#allocation11], %s69
      %s71 = sshll.u32 [#allocation12], 4
      %s72 = int_to_ptr.vmem [resolvable:$true] %s71
      %77 = dma.hbm_to_vmem [thread:$0]  %s6, 1024, %s72, [#allocation11], 64, 64, 4
    $region29: #{tpu_custom_call.1} parent=1 // pred_fallthru
      _
    // Predicated region
    $region30: #{tpu_custom_call.1} parent=1 // pred_check
      _
    $region31: #{tpu_custom_call.1} parent=1 // pred_check_branch
      %79 = sbr.rel (0) target = $region33
    $region32: #{tpu_custom_call.1} parent=1 // pred_region
      _
    $region33: #{tpu_custom_call.1} parent=1 // pred_fallthru
      _
    // Predicated region
    $region34: #{tpu_custom_call.1} parent=1 // pred_check
      _
    $region35: #{tpu_custom_call.1} parent=1 // pred_check_branch
      %81 = sbr.rel (0) target = $region37
    $region36: #{tpu_custom_call.1} parent=1 // pred_region
      %82 = dma.done [#allocation5], 128
    $region37: #{tpu_custom_call.1} parent=1 // pred_fallthru
      _
    // Predicated region
    $region38: #{tpu_custom_call.1} parent=1 // pred_check
      _
    $region39: #{tpu_custom_call.1} parent=1 // pred_check_branch
      %84 = sbr.rel (0) target = $region41
    $region40: #{tpu_custom_call.1} parent=1 // pred_region
      %85 = dma.done [#allocation8], 128
    $region41: #{tpu_custom_call.1} parent=1 // pred_fallthru
      _
    // Predicated region
    $region42: #{tpu_custom_call.1} parent=1 // pred_check
      _
    $region43: #{tpu_custom_call.1} parent=1 // pred_check_branch
      %87 = sbr.rel (0) target = $region45
    $region44: #{tpu_custom_call.1} parent=1 // pred_region
      %88 = dma.done [#allocation8], 1024
    $region45: #{tpu_custom_call.1} parent=1 // pred_fallthru
      _
    // Predicated region
    $region46: #{tpu_custom_call.1} parent=1 // pred_check
      _
    $region47: #{tpu_custom_call.1} parent=1 // pred_check_branch
      %90 = sbr.rel (0) target = $region49
    $region48: #{tpu_custom_call.1} parent=1 // pred_region
      %91 = dma.done [#allocation11], 1024
    $region49: #{tpu_custom_call.1} parent=1 // pred_fallthru
      _
    // Predicated region
    $region50: #{tpu_custom_call.1} parent=1 // pred_check
      _
    $region51: #{tpu_custom_call.1} parent=1 // pred_check_branch
      %93 = sbr.rel (0) target = $region53
    $region52: #{tpu_custom_call.1} parent=1 // pred_region
      %94 = dma.done [#allocation11], 1024
    $region53: #{tpu_custom_call.1} parent=1 // pred_fallthru
      _
    %s96 = sld [smem:[#allocation3]]
    %97 = vst [vmem:[#allocation2] sm:$0xff] 0
    %v98 = vld [vmem:[#allocation4] sm:$0xff]
    %v99 = vpack.c.bf16 %v98, %v98
    %vm100 = vcmask 257024
    %101 = vst.msk [vmem:[#allocation2] sm:$0xf] %vm100, %v99
    %v102 = vld [vmem:[#allocation7] sm:$0xff]
    %v103 = vpack.c.bf16 %v102, %v102
    %v105 = vrot.slane %v103, 4
    %vm107 = vcmask 261124
    %108 = vst.msk [vmem:[#allocation2] sm:$0xf0] %vm107, %v105
    %v109 = vld [vmem:[#allocation2] sm:$0xff]
    %v110 = vld [vmem:[#allocation9] sm:$0xf]
    %v111 = vld [vmem:[#allocation9 + $0x4] sm:$0xf]
    %v112 = vld [vmem:[#allocation9 + $0x8] sm:$0xf]
    %v113 = vld [vmem:[#allocation9 + $0xc] sm:$0xf]
    %v114 = vld [vmem:[#allocation9 + $0x10] sm:$0xf]
    %v115 = vld [vmem:[#allocation9 + $0x14] sm:$0xf]
    %v116 = vld [vmem:[#allocation9 + $0x18] sm:$0xf]
    %v117 = vld [vmem:[#allocation9 + $0x1c] sm:$0xf]
    %v118 = vld [vmem:[#allocation9 + $0x20] sm:$0xf]
    %v119 = vld [vmem:[#allocation9 + $0x24] sm:$0xf]
    %v120 = vld [vmem:[#allocation9 + $0x28] sm:$0xf]
    %v121 = vld [vmem:[#allocation9 + $0x2c] sm:$0xf]
    %v122 = vld [vmem:[#allocation9 + $0x30] sm:$0xf]
    %v123 = vld [vmem:[#allocation9 + $0x34] sm:$0xf]
    %v124 = vld [vmem:[#allocation9 + $0x38] sm:$0xf]
    %v125 = vld [vmem:[#allocation9 + $0x3c] sm:$0xf]
    %v142 = vunpack.c.l.b16 %v110
    %v143 = vunpack.c.l.b16 %v111
    %v144 = vunpack.c.l.b16 %v112
    %v145 = vunpack.c.l.b16 %v113
    %v146 = vunpack.c.l.b16 %v114
    %v147 = vunpack.c.l.b16 %v115
    %v148 = vunpack.c.l.b16 %v116
    %v149 = vunpack.c.l.b16 %v117
    %v150 = vunpack.c.l.b16 %v118
    %v151 = vunpack.c.l.b16 %v119
    %v152 = vunpack.c.l.b16 %v120
    %v153 = vunpack.c.l.b16 %v121
    %v154 = vunpack.c.l.b16 %v122
    %v155 = vunpack.c.l.b16 %v123
    %v156 = vunpack.c.l.b16 %v124
    %v157 = vunpack.c.l.b16 %v125
    %v158 = vpack.c.b16 %v143, %v142
    %v159 = vpack.c.b16 %v145, %v144
    %v160 = vpack.c.b16 %v147, %v146
    %v161 = vpack.c.b16 %v149, %v148
    %v162 = vpack.c.b16 %v151, %v150
    %v163 = vpack.c.b16 %v153, %v152
    %v164 = vpack.c.b16 %v155, %v154
    %v165 = vpack.c.b16 %v157, %v156
    %174 = vmatprep.subr.bf16.mxu0 0
    %175 = vmatpush1.bf16.msra.mxu0 %v158
    %176 = vmatprep.subr.bf16.mxu0 0
    %177 = vmatpush1.bf16.msra.mxu0 %v159
    %178 = vmatprep.subr.bf16.mxu0 0
    %179 = vmatpush1.bf16.msra.mxu0 %v160
    %180 = vmatprep.subr.bf16.mxu0 0
    %181 = vmatpush1.bf16.msra.mxu0 %v161
    %182 = vmatprep.subr.bf16.mxu0 0
    %183 = vmatpush1.bf16.msra.mxu0 %v162
    %184 = vmatprep.subr.bf16.mxu0 0
    %185 = vmatpush1.bf16.msra.mxu0 %v163
    %186 = vmatprep.subr.bf16.mxu0 0
    %187 = vmatpush1.bf16.msra.mxu0 %v164
    %188 = vmatprep.subr.bf16.mxu0 0
    %189 = vmatpush1.bf16.msra.mxu0 %v165
    %190 = vmatprep.subr.bf16.mxu0 0
    %191 = vmatpush1.bf16.msra.mxu0 0
    %192 = vmatprep.subr.bf16.mxu0 0
    %193 = vmatpush1.bf16.msra.mxu0 0
    %194 = vmatprep.subr.bf16.mxu0 0
    %195 = vmatpush1.bf16.msra.mxu0 0
    %196 = vmatprep.subr.bf16.mxu0 0
    %197 = vmatpush1.bf16.msra.mxu0 0
    %198 = vmatprep.subr.bf16.mxu0 0
    %199 = vmatpush1.bf16.msra.mxu0 0
    %200 = vmatprep.subr.bf16.mxu0 0
    %201 = vmatpush1.bf16.msra.mxu0 0
    %202 = vmatprep.subr.bf16.mxu0 0
    %203 = vmatpush1.bf16.msra.mxu0 0
    %204 = vmatprep.subr.bf16.mxu0 0
    %205 = vmatpush1.bf16.msra.mxu0 0
    %206 = vmatprep.mubr.bf16.mxu0 0
    %207 = vmatmul.mubr.bf16.gmra.mrb[0].mxu0 %v109
    %v208 = vpop.f32.mrb[0].mxu0
    %v209 = vadd.f32 0.0, %v208
    %v210 = vpop.f32.mrb[0].mxu0
    %v211 = vpop.f32.mrb[0].mxu0
    %v212 = vadd.f32 0.0, %v211
    %v213 = vpop.f32.mrb[0].mxu0
    %214 = vdwg.mxu0
    %v215 = vlaneseq
    %v216 = vshrl.u32 %v215, 7
    %v217 = vadd.s32 %v216, 8
    %vm218 = vcmp.lt.s32.totalorder %v216, 8
    %vm219 = vcmp.lt.s32.totalorder %v217, 8
    %s220 = ssub.f32 1.0, %s96
    %v221 = vstv %s96
    %v222 = vstv %s220
    %v223 = vsel %vm218, %v221, %v222
    %v224 = vsel %vm219, %v221, %v222
    %v225 = vmul.f32 %v223, %v209
    %v226 = vmul.f32 %v224, %v212
    %v227 = vld [vmem:[%s4] sm:$0x1]
    %v229 = vlaneseq
    %v230 = vshrl.u32 %v229, 7
    %v231 = vsub.s32 0, %v230
    %v232 = vrot.slane %v227, %v231
    %v234 = vadd.f32 %v225, %v232
    %v235 = vadd.f32 %v226, %v232
    %v236 = vmax.f32 %v234, 0.0
    %v237 = vmax.f32 %v235, 0.0
    %v238 = vpack.c.bf16 %v236, %v236
    %v239 = vpack.c.bf16 %v237, %v237
    %v240 = vld [vmem:[#allocation10] sm:$0xf]
    %v241 = vld [vmem:[#allocation10 + $0x4] sm:$0xf]
    %v242 = vld [vmem:[#allocation10 + $0x8] sm:$0xf]
    %v243 = vld [vmem:[#allocation10 + $0xc] sm:$0xf]
    %v244 = vld [vmem:[#allocation10 + $0x10] sm:$0xf]
    %v245 = vld [vmem:[#allocation10 + $0x14] sm:$0xf]
    %v246 = vld [vmem:[#allocation10 + $0x18] sm:$0xf]
    %v247 = vld [vmem:[#allocation10 + $0x1c] sm:$0xf]
    %v248 = vld [vmem:[#allocation10 + $0x20] sm:$0xf]
    %v249 = vld [vmem:[#allocation10 + $0x24] sm:$0xf]
    %v250 = vld [vmem:[#allocation10 + $0x28] sm:$0xf]
    %v251 = vld [vmem:[#allocation10 + $0x2c] sm:$0xf]
    %v252 = vld [vmem:[#allocation10 + $0x30] sm:$0xf]
    %v253 = vld [vmem:[#allocation10 + $0x34] sm:$0xf]
    %v254 = vld [vmem:[#allocation10 + $0x38] sm:$0xf]
    %v255 = vld [vmem:[#allocation10 + $0x3c] sm:$0xf]
    %v256 = vld [vmem:[#allocation12] sm:$0xf]
    %v257 = vld [vmem:[#allocation12 + $0x4] sm:$0xf]
    %v258 = vld [vmem:[#allocation12 + $0x8] sm:$0xf]
    %v259 = vld [vmem:[#allocation12 + $0xc] sm:$0xf]
    %v260 = vld [vmem:[#allocation12 + $0x10] sm:$0xf]
    %v261 = vld [vmem:[#allocation12 + $0x14] sm:$0xf]
    %v262 = vld [vmem:[#allocation12 + $0x18] sm:$0xf]
    %v263 = vld [vmem:[#allocation12 + $0x1c] sm:$0xf]
    %v264 = vld [vmem:[#allocation12 + $0x20] sm:$0xf]
    %v265 = vld [vmem:[#allocation12 + $0x24] sm:$0xf]
    %v266 = vld [vmem:[#allocation12 + $0x28] sm:$0xf]
    %v267 = vld [vmem:[#allocation12 + $0x2c] sm:$0xf]
    %v268 = vld [vmem:[#allocation12 + $0x30] sm:$0xf]
    %v269 = vld [vmem:[#allocation12 + $0x34] sm:$0xf]
    %v270 = vld [vmem:[#allocation12 + $0x38] sm:$0xf]
    %v271 = vld [vmem:[#allocation12 + $0x3c] sm:$0xf]
    %v288 = vunpack.c.l.b16 %v256
    %v289 = vunpack.c.l.b16 %v257
    %v290 = vunpack.c.l.b16 %v258
    %v291 = vunpack.c.l.b16 %v259
    %v292 = vunpack.c.l.b16 %v260
    %v293 = vunpack.c.l.b16 %v261
    %v294 = vunpack.c.l.b16 %v262
    %v295 = vunpack.c.l.b16 %v263
    %v296 = vunpack.c.l.b16 %v264
    %v297 = vunpack.c.l.b16 %v265
    %v298 = vunpack.c.l.b16 %v266
    %v299 = vunpack.c.l.b16 %v267
    %v300 = vunpack.c.l.b16 %v268
    %v301 = vunpack.c.l.b16 %v269
    %v302 = vunpack.c.l.b16 %v270
    %v303 = vunpack.c.l.b16 %v271
    %v304 = vpack.c.b16 %v289, %v288
    %v305 = vpack.c.b16 %v291, %v290
    %v306 = vpack.c.b16 %v293, %v292
    %v307 = vpack.c.b16 %v295, %v294
    %v308 = vpack.c.b16 %v297, %v296
    %v309 = vpack.c.b16 %v299, %v298
    %v310 = vpack.c.b16 %v301, %v300
    %v311 = vpack.c.b16 %v303, %v302
    %320 = vmatprep.subr.bf16.mxu0 0
    %321 = vmatpush1.bf16.msra.mxu0 %v304
    %322 = vmatprep.subr.bf16.mxu0 0
    %323 = vmatpush1.bf16.msra.mxu0 %v305
    %324 = vmatprep.subr.bf16.mxu0 0
    %325 = vmatpush1.bf16.msra.mxu0 %v306
    %326 = vmatprep.subr.bf16.mxu0 0
    %327 = vmatpush1.bf16.msra.mxu0 %v307
    %328 = vmatprep.subr.bf16.mxu0 0
    %329 = vmatpush1.bf16.msra.mxu0 %v308
    %330 = vmatprep.subr.bf16.mxu0 0
    %331 = vmatpush1.bf16.msra.mxu0 %v309
    %332 = vmatprep.subr.bf16.mxu0 0
    %333 = vmatpush1.bf16.msra.mxu0 %v310
    %334 = vmatprep.subr.bf16.mxu0 0
    %335 = vmatpush1.bf16.msra.mxu0 %v311
    %336 = vmatprep.subr.bf16.mxu0 0
    %337 = vmatpush1.bf16.msra.mxu0 0
    %338 = vmatprep.subr.bf16.mxu0 0
    %339 = vmatpush1.bf16.msra.mxu0 0
    %340 = vmatprep.subr.bf16.mxu0 0
    %341 = vmatpush1.bf16.msra.mxu0 0
    %342 = vmatprep.subr.bf16.mxu0 0
    %343 = vmatpush1.bf16.msra.mxu0 0
    %344 = vmatprep.subr.bf16.mxu0 0
    %345 = vmatpush1.bf16.msra.mxu0 0
    %346 = vmatprep.subr.bf16.mxu0 0
    %347 = vmatpush1.bf16.msra.mxu0 0
    %348 = vmatprep.subr.bf16.mxu0 0
    %349 = vmatpush1.bf16.msra.mxu0 0
    %350 = vmatprep.subr.bf16.mxu0 0
    %351 = vmatpush1.bf16.msra.mxu0 0
    %352 = vmatprep.mubr.bf16.mxu0 0
    %353 = vmatmul.mubr.bf16.gmra.mrb[0].mxu0 %v239
    %v354 = vpop.f32.mrb[0].mxu0
    %v355 = vadd.f32 0.0, %v354
    %v356 = vpop.f32.mrb[0].mxu0
    %v357 = vpop.f32.mrb[0].mxu0
    %v358 = vpop.f32.mrb[0].mxu0
    %359 = vdwg.mxu0
    %v376 = vunpack.c.l.b16 %v240
    %v377 = vunpack.c.l.b16 %v241
    %v378 = vunpack.c.l.b16 %v242
    %v379 = vunpack.c.l.b16 %v243
    %v380 = vunpack.c.l.b16 %v244
    %v381 = vunpack.c.l.b16 %v245
    %v382 = vunpack.c.l.b16 %v246
    %v383 = vunpack.c.l.b16 %v247
    %v384 = vunpack.c.l.b16 %v248
    %v385 = vunpack.c.l.b16 %v249
    %v386 = vunpack.c.l.b16 %v250
    %v387 = vunpack.c.l.b16 %v251
    %v388 = vunpack.c.l.b16 %v252
    %v389 = vunpack.c.l.b16 %v253
    %v390 = vunpack.c.l.b16 %v254
    %v391 = vunpack.c.l.b16 %v255
    %v392 = vpack.c.b16 %v377, %v376
    %v393 = vpack.c.b16 %v379, %v378
    %v394 = vpack.c.b16 %v381, %v380
    %v395 = vpack.c.b16 %v383, %v382
    %v396 = vpack.c.b16 %v385, %v384
    %v397 = vpack.c.b16 %v387, %v386
    %v398 = vpack.c.b16 %v389, %v388
    %v399 = vpack.c.b16 %v391, %v390
    %408 = vmatprep.subr.bf16.mxu0 0
    %409 = vmatpush1.bf16.msra.mxu0 %v392
    %410 = vmatprep.subr.bf16.mxu0 0
    %411 = vmatpush1.bf16.msra.mxu0 %v393
    %412 = vmatprep.subr.bf16.mxu0 0
    %413 = vmatpush1.bf16.msra.mxu0 %v394
    %414 = vmatprep.subr.bf16.mxu0 0
    %415 = vmatpush1.bf16.msra.mxu0 %v395
    %416 = vmatprep.subr.bf16.mxu0 0
    %417 = vmatpush1.bf16.msra.mxu0 %v396
    %418 = vmatprep.subr.bf16.mxu0 0
    %419 = vmatpush1.bf16.msra.mxu0 %v397
    %420 = vmatprep.subr.bf16.mxu0 0
    %421 = vmatpush1.bf16.msra.mxu0 %v398
    %422 = vmatprep.subr.bf16.mxu0 0
    %423 = vmatpush1.bf16.msra.mxu0 %v399
    %424 = vmatprep.subr.bf16.mxu0 0
    %425 = vmatpush1.bf16.msra.mxu0 0
    %426 = vmatprep.subr.bf16.mxu0 0
    %427 = vmatpush1.bf16.msra.mxu0 0
    %428 = vmatprep.subr.bf16.mxu0 0
    %429 = vmatpush1.bf16.msra.mxu0 0
    %430 = vmatprep.subr.bf16.mxu0 0
    %431 = vmatpush1.bf16.msra.mxu0 0
    %432 = vmatprep.subr.bf16.mxu0 0
    %433 = vmatpush1.bf16.msra.mxu0 0
    %434 = vmatprep.subr.bf16.mxu0 0
    %435 = vmatpush1.bf16.msra.mxu0 0
    %436 = vmatprep.subr.bf16.mxu0 0
    %437 = vmatpush1.bf16.msra.mxu0 0
    %438 = vmatprep.subr.bf16.mxu0 0
    %439 = vmatpush1.bf16.msra.mxu0 0
    %440 = vmatprep.mubr.bf16.mxu0 0
    %441 = vmatmul.mubr.bf16.gmra.mrb[0].mxu0 %v238
    %v442 = vpop.f32.mrb[0].mxu0
    %v443 = vadd.f32 %v355, %v442
    %v444 = vpop.f32.mrb[0].mxu0
    %v445 = vpop.f32.mrb[0].mxu0
    %v446 = vpop.f32.mrb[0].mxu0
    %447 = vdwg.mxu0
    %v448 = vld [vmem:[%s7] sm:$0x1]
    %v450 = vlaneseq
    %v451 = vshrl.u32 %v450, 7
    %v452 = vsub.s32 0, %v451
    %v453 = vrot.slane %v448, %v452
    %v455 = vadd.f32 %v443, %v453
    %456 = vst [vmem:[#allocation13] sm:$0xff] %v455
    // Predicated region
    $region54: #{tpu_custom_call.1} parent=1 // pred_check
      _
    $region55: #{tpu_custom_call.1} parent=1 // pred_check_branch
      %458 = sbr.rel (0) target = $region57
    $region56: #{tpu_custom_call.1} parent=1 // pred_region
      %s460 = ssub.s32 128, 128
      %461 = vsyncadd [#allocation6], %s460
      %s463 = sshll.u32 [#allocation13], 4
      %s464 = int_to_ptr.vmem [resolvable:$true] %s463
      %466 = dma.vmem_to_hbm [thread:$0]  %s464, 128, %s8, [#allocation6]
    $region57: #{tpu_custom_call.1} parent=1 // pred_fallthru
      _
    // Predicated region
    $region58: #{tpu_custom_call.1} parent=1 // pred_check
      _
    $region59: #{tpu_custom_call.1} parent=1 // pred_check_branch
      %468 = sbr.rel (0) target = $region61
    $region60: #{tpu_custom_call.1} parent=1 // pred_region
      %469 = dma.done [#allocation6], 128
    $region61: #{tpu_custom_call.1} parent=1 // pred_fallthru
      _
    %470 = vsyncpa [#allocation5], 1
    %471 = vsyncpa [#allocation8], 1
    %472 = vsyncpa [#allocation11], 1
    %473 = vsyncpa [#allocation6], 1

</llo_original>
